<compile_context>
chip_gen: v6e
topology: v6e:2x2x1
jax: 0.10.0
libtpu: 0.0.40
codegen_flags: <defaults>
</compile_context>

<pallas_src>
import functools

import jax
import jax.numpy as jnp
from jax.experimental import pallas as pl
from jax.experimental.pallas import tpu as pltpu


def _contrastive_loss_kernel(a_ref, c_ref, d_ref, out_ref, acc_ref, *, batch, tile_b):
    i = pl.program_id(0)

    @pl.when(i == 0)
    def _init():
        acc_ref[0, 0] = jnp.float32(0.0)

    # Native-dtype blocks DMA'd in; do the math in f32 on the VPU.
    a = a_ref[...].astype(jnp.float32)          # (TB, D)
    c = c_ref[...].astype(jnp.float32)          # (TB, D)
    d = d_ref[...].astype(jnp.float32)          # (TB, 1)

    eps2 = jnp.float32(1e-07) * jnp.float32(1e-07)

    dot = jnp.sum(a * c, axis=-1, keepdims=True)   # (TB, 1)
    na2 = jnp.sum(a * a, axis=-1, keepdims=True)   # (TB, 1)
    nc2 = jnp.sum(c * c, axis=-1, keepdims=True)   # (TB, 1)

    # 1 / max(||x||, eps) == rsqrt(max(||x||^2, eps^2))  (sqrt is monotone).
    # PyTorch CosineSimilarity clamps each norm separately.
    inv = jax.lax.rsqrt(jnp.maximum(na2, eps2)) * jax.lax.rsqrt(jnp.maximum(nc2, eps2))
    score = dot * inv

    diff = score - d
    sq = diff * diff

    # Mask rows of a ragged last tile (and any garbage in the padded region).
    row = i * tile_b + jax.lax.broadcasted_iota(jnp.int32, sq.shape, 0)
    sq = jnp.where(row < batch, sq, jnp.float32(0.0))

    acc_ref[0, 0] += jnp.sum(sq)

    @pl.when(i == pl.num_programs(0) - 1)
    def _finalize():
        out_ref[0, 0] = acc_ref[0, 0] / jnp.float32(batch)


def _round_up(x, m):
    return ((x + m - 1) // m) * m


def _pick_tile_b(batch, d, itemsize):
    """Pick a batch tile: big for pipelining, but safe for v7x's smaller VMEM."""
    # Sub-32-bit dtypes pack along sublanes -> keep second-minor dim aligned.
    sublane = 8 * max(1, 4 // max(1, itemsize))
    # 2 inputs x 2 pipeline buffers x tile_b x d x itemsize <= budget.
    budget_bytes = 16 * 1024 * 1024
    tb = budget_bytes // max(1, 4 * d * itemsize)
    tb = max(sublane, min(1024, tb))
    tb = (tb // sublane) * sublane
    tb = min(tb, _round_up(batch, sublane))
    return tb, sublane


def _contrastive_loss_ref(anchor, contrastive, distance):
    eps = jnp.float32(1e-07)
    a = anchor.astype(jnp.float32)
    c = contrastive.astype(jnp.float32)
    d = distance.astype(jnp.float32)
    dot = jnp.sum(a * c, axis=-1)
    na = jnp.maximum(jnp.sqrt(jnp.sum(a * a, axis=-1)), eps)
    nc = jnp.maximum(jnp.sqrt(jnp.sum(c * c, axis=-1)), eps)
    score = dot / (na * nc)
    return jnp.mean((score - d) ** 2)


def contrastive_loss(anchor, contrastive, distance, *, tile_b=None, force_kernel=False):
    """anchor, contrastive: (B, D); distance: (B,) -> scalar f32 loss."""
    B, D = anchor.shape

    # Tiny problems: fixed Pallas dispatch overhead dwarfs the work; let XLA fuse.
    if not force_kernel and B * D < (1 << 20):
        return _contrastive_loss_ref(anchor, contrastive, distance)

    itemsize = jnp.dtype(anchor.dtype).itemsize
    auto_tb, sublane = _pick_tile_b(B, D, itemsize)
    if tile_b is None:
        tile_b = auto_tb
    assert tile_b % sublane == 0, (tile_b, sublane)

    distance2d = distance.reshape(B, 1)
    num_tiles = pl.cdiv(B, tile_b)

    kernel = functools.partial(_contrastive_loss_kernel, batch=B, tile_b=tile_b)

    out = pl.pallas_call(
        kernel,
        out_shape=jax.ShapeDtypeStruct((1, 1), jnp.float32),
        grid=(num_tiles,),
        in_specs=[
            pl.BlockSpec((tile_b, D), lambda i: (i, 0)),
            pl.BlockSpec((tile_b, D), lambda i: (i, 0)),
            pl.BlockSpec((tile_b, 1), lambda i: (i, 0)),
        ],
        out_specs=pl.BlockSpec(memory_space=pltpu.SMEM),
        scratch_shapes=[pltpu.SMEM((1, 1), jnp.float32)],
        compiler_params=pltpu.CompilerParams(
            dimension_semantics=("arbitrary",),  # reduction axis (accumulator)
        ),
    )(anchor, contrastive, distance2d)
    return out[0, 0]


if __name__ == "__main__":
    key = jax.random.PRNGKey(0)
    k1, k2, k3 = jax.random.split(key, 3)

    # Small shape consistent with the module: batch of embedding pairs, hidden 32.
    B, D = 8, 32
    anchor = jax.random.normal(k1, (B, D), dtype=jnp.float32)
    contrastive = jax.random.normal(k2, (B, D), dtype=jnp.float32)
    distance = jax.random.uniform(k3, (B,), dtype=jnp.float32)

    loss = contrastive_loss(anchor, contrastive, distance, force_kernel=True)
    jax.block_until_ready(loss)
    ref = _contrastive_loss_ref(anchor, contrastive, distance)
    assert jnp.allclose(loss, ref, atol=1e-5, rtol=1e-5), (loss, ref)

    # Exercise the tiled + masked path: multiple tiles, B not a tile multiple.
    B2, D2 = 20, 32
    k4, k5, k6 = jax.random.split(jax.random.PRNGKey(1), 3)
    a2 = jax.random.normal(k4, (B2, D2), dtype=jnp.float32)
    c2 = jax.random.normal(k5, (B2, D2), dtype=jnp.float32)
    d2 = jax.random.uniform(k6, (B2,), dtype=jnp.float32)
    loss2 = contrastive_loss(a2, c2, d2, tile_b=8, force_kernel=True)
    jax.block_until_ready(loss2)
    ref2 = _contrastive_loss_ref(a2, c2, d2)
    assert jnp.allclose(loss2, ref2, atol=1e-5, rtol=1e-5), (loss2, ref2)

    # Native-dtype (bf16) DMA path: no wrapper upcast, f32 math in-kernel.
    a3 = a2.astype(jnp.bfloat16)
    c3 = c2.astype(jnp.bfloat16)
    d3 = d2.astype(jnp.bfloat16)
    loss3 = contrastive_loss(a3, c3, d3, force_kernel=True)
    jax.block_until_ready(loss3)
    ref3 = _contrastive_loss_ref(a3, c3, d3)
    assert jnp.allclose(loss3, ref3, atol=2e-2, rtol=2e-2), (loss3, ref3)

    print("KERNEL_OK")
</pallas_src>

<mosaic_0001>
module attributes {stable_mosaic.version = 11 : i64} {
  func.func @_contrastive_loss_kernel(%arg0: i32, %arg1: memref<8x32xf32, #tpu.memory_space<vmem>>, %arg2: memref<8x32xf32, #tpu.memory_space<vmem>>, %arg3: memref<8x1xf32, #tpu.memory_space<vmem>>, %arg4: memref<1x1xf32, #tpu.memory_space<smem>>, %arg5: memref<1x1xf32, #tpu.memory_space<smem>>) attributes {dimension_semantics = [#tpu.dimension_semantics<arbitrary>], iteration_bounds = array<i64: 1>, scalar_prefetch = 0 : i64, scratch_operands = 1 : i64, tpu.core_type = #tpu.core_type<tc>, window_params = [{transform_indices = @transform_0, window_bounds = array<i64: 8, 32>}, {transform_indices = @transform_1, window_bounds = array<i64: 8, 32>}, {transform_indices = @transform_2, window_bounds = array<i64: 8, 1>}, {transform_indices = @transform_3, window_bounds = array<i64: 1, 1>}]} {
    %c0_i32 = arith.constant 0 : i32
    %0 = arith.cmpi eq, %arg0, %c0_i32 : i32
    %1 = arith.extui %0 : i1 to i32
    %c0_i32_0 = arith.constant 0 : i32
    %2 = arith.cmpi ne, %1, %c0_i32_0 : i32
    scf.if %2 {
      %cst_19 = arith.constant 0.000000e+00 : f32
      %c0_20 = arith.constant 0 : index
      %c0_21 = arith.constant 0 : index
      %44 = memref.load %arg5[%c0_20, %c0_21] : memref<1x1xf32, #tpu.memory_space<smem>>
      memref.store %cst_19, %arg5[%c0_20, %c0_21] : memref<1x1xf32, #tpu.memory_space<smem>>
    } else {
    }
    %c0 = arith.constant 0 : index
    %c0_1 = arith.constant 0 : index
    %3 = vector.load %arg1[%c0, %c0_1] : memref<8x32xf32, #tpu.memory_space<vmem>>, vector<8x32xf32>
    %c0_2 = arith.constant 0 : index
    %c0_3 = arith.constant 0 : index
    %4 = vector.load %arg2[%c0_2, %c0_3] : memref<8x32xf32, #tpu.memory_space<vmem>>, vector<8x32xf32>
    %c0_4 = arith.constant 0 : index
    %c0_5 = arith.constant 0 : index
    %5 = vector.load %arg3[%c0_4, %c0_5] : memref<8x1xf32, #tpu.memory_space<vmem>>, vector<8x1xf32>
    %cst = arith.constant 1.000000e-07 : f32
    %cst_6 = arith.constant 1.000000e-07 : f32
    %6 = arith.mulf %cst, %cst_6 : f32
    %7 = arith.mulf %3, %4 : vector<8x32xf32>
    %cst_7 = arith.constant dense<0.000000e+00> : vector<8xf32>
    %8 = vector.multi_reduction <add>, %7, %cst_7 [1] : vector<8x32xf32> to vector<8xf32>
    %9 = vector.shape_cast %8 : vector<8xf32> to vector<8x1xf32>
    %10 = arith.mulf %3, %3 : vector<8x32xf32>
    %cst_8 = arith.constant dense<0.000000e+00> : vector<8xf32>
    %11 = vector.multi_reduction <add>, %10, %cst_8 [1] : vector<8x32xf32> to vector<8xf32>
    %12 = vector.shape_cast %11 : vector<8xf32> to vector<8x1xf32>
    %13 = arith.mulf %4, %4 : vector<8x32xf32>
    %cst_9 = arith.constant dense<0.000000e+00> : vector<8xf32>
    %14 = vector.multi_reduction <add>, %13, %cst_9 [1] : vector<8x32xf32> to vector<8xf32>
    %15 = vector.shape_cast %14 : vector<8xf32> to vector<8x1xf32>
    %16 = vector.broadcast %6 : f32 to vector<8x1xf32>
    %17 = arith.maximumf %12, %16 : vector<8x1xf32>
    %18 = math.rsqrt %17 : vector<8x1xf32>
    %19 = vector.broadcast %6 : f32 to vector<8x1xf32>
    %20 = arith.maximumf %15, %19 : vector<8x1xf32>
    %21 = math.rsqrt %20 : vector<8x1xf32>
    %22 = arith.mulf %18, %21 : vector<8x1xf32>
    %23 = arith.mulf %9, %22 : vector<8x1xf32>
    %24 = arith.subf %23, %5 : vector<8x1xf32>
    %25 = arith.mulf %24, %24 : vector<8x1xf32>
    %c8_i32 = arith.constant 8 : i32
    %26 = arith.muli %arg0, %c8_i32 : i32
    %27 = tpu.iota {dimensions = array<i32: 0>} : vector<8x1xi32>
    %28 = vector.broadcast %26 : i32 to vector<8x1xi32>
    %29 = arith.addi %28, %27 : vector<8x1xi32>
    %c8_i32_10 = arith.constant 8 : i32
    %30 = vector.broadcast %c8_i32_10 : i32 to vector<8x1xi32>
    %31 = arith.cmpi slt, %29, %30 : vector<8x1xi32>
    %cst_11 = arith.constant 0.000000e+00 : f32
    %32 = vector.broadcast %cst_11 : f32 to vector<8x1xf32>
    %33 = arith.select %31, %25, %32 : vector<8x1xi1>, vector<8x1xf32>
    %c0_12 = arith.constant 0 : index
    %c0_13 = arith.constant 0 : index
    %34 = memref.load %arg5[%c0_12, %c0_13] : memref<1x1xf32, #tpu.memory_space<smem>>
    %35 = vector.shape_cast %33 : vector<8x1xf32> to vector<1x8x1xf32>
    %cst_14 = arith.constant dense<0.000000e+00> : vector<1xf32>
    %36 = vector.multi_reduction <add>, %35, %cst_14 [1, 2] : vector<1x8x1xf32> to vector<1xf32>
    %37 = vector.shape_cast %36 : vector<1xf32> to vector<1x1x1xf32>
    %38 = vector.extract %37[0, 0, 0] : f32 from vector<1x1x1xf32>
    %39 = arith.addf %34, %38 : f32
    %c0_15 = arith.constant 0 : index
    %c0_16 = arith.constant 0 : index
    %40 = memref.load %arg5[%c0_15, %c0_16] : memref<1x1xf32, #tpu.memory_space<smem>>
    memref.store %39, %arg5[%c0_15, %c0_16] : memref<1x1xf32, #tpu.memory_space<smem>>
    %c0_i32_17 = arith.constant 0 : i32
    %41 = arith.cmpi eq, %arg0, %c0_i32_17 : i32
    %42 = arith.extui %41 : i1 to i32
    %c0_i32_18 = arith.constant 0 : i32
    %43 = arith.cmpi ne, %42, %c0_i32_18 : i32
    scf.if %43 {
      %c0_19 = arith.constant 0 : index
      %c0_20 = arith.constant 0 : index
      %44 = memref.load %arg5[%c0_19, %c0_20] : memref<1x1xf32, #tpu.memory_space<smem>>
      %cst_21 = arith.constant 8.000000e+00 : f32
      %45 = arith.divf %44, %cst_21 : f32
      %c0_22 = arith.constant 0 : index
      %c0_23 = arith.constant 0 : index
      %46 = memref.load %arg4[%c0_22, %c0_23] : memref<1x1xf32, #tpu.memory_space<smem>>
      memref.store %45, %arg4[%c0_22, %c0_23] : memref<1x1xf32, #tpu.memory_space<smem>>
    } else {
    }
    return
  }
  func.func @transform_0(%arg0: i32) -> (i32, i32) {
    %c0_i32 = arith.constant 0 : i32
    %c0_i32_0 = arith.constant 0 : i32
    return %arg0, %c0_i32 : i32, i32
  }
  func.func @transform_1(%arg0: i32) -> (i32, i32) {
    %c0_i32 = arith.constant 0 : i32
    %c0_i32_0 = arith.constant 0 : i32
    return %arg0, %c0_i32 : i32, i32
  }
  func.func @transform_2(%arg0: i32) -> (i32, i32) {
    %c0_i32 = arith.constant 0 : i32
    %c0_i32_0 = arith.constant 0 : i32
    return %arg0, %c0_i32 : i32, i32
  }
  func.func @transform_3(%arg0: i32) -> (i32, i32) {
    %c0_i32 = arith.constant 0 : i32
    %c0_i32_0 = arith.constant 0 : i32
    %c0_i32_1 = arith.constant 0 : i32
    return %c0_i32, %c0_i32_0 : i32, i32
  }
}

</mosaic_0001>

<llo_original>
// kernel: tpu_custom_call.1
$region0: #{tpu_custom_call.1}
  #allocation0 [shape = 'u32[]', space=smem, size = 0x4, offset = 0x4, fixed_abs, tag = 'smem constant byte address 0x4 - core index']
  #allocation1 [shape = 'u32[144,128]{1,0:T(1,128)}', space=vmem, size = 0x12000, scoped, tag = 'internal scratch']
  #allocation2 [shape = 'f32[1,1]{1,0:T(1,128)}', space=smem, size = 0x200, scoped, tag = 'scratch operand']
  %s0 = inlined_call_operand.vmem [shape: f32[8,32], index: 0, kind: input, shape index: {}]
  %s1 = inlined_call_operand.hbm [shape: f32[8,32], index: 1, kind: input, shape index: {}]
  %s2 = inlined_call_operand.vmem [shape: f32[8,1], index: 2, kind: input, shape index: {}]
  %s3 = inlined_call_operand.hbm [shape: f32[1,1], index: 3, kind: output, shape index: {}]
  %s4 = sld [smem:[#allocation0]]
  $region34: #{tpu_custom_call.1} parent=0
    _
  %s6 = ssub.s32 1, %s4
  %s7 = scalar_select 0, %s6, %s4
  $region1: #{tpu_custom_call.1} parent=0
    #allocation3 [shape = 'u8[4096]{0}', space=vmem, size = 0x1000, scoped, tag = 'input window, operand 1, single buffered']
    #allocation4 [shape = 's32[1]{0}', space=sflag, size = 0x4, scoped, tag = 'scoped memory for tpu_custom_call.1']
    #allocation5 [shape = 's32[1]{0}', space=sflag, size = 0x4, scoped, tag = 'scoped memory for tpu_custom_call.1']
    #allocation6 [shape = 'u8[512]{0}', space=smem, size = 0x200, scoped, tag = 'output window, operand 0, single buffered']
    %8 = vsyncpa [#allocation4], 0
    %9 = vsyncpa [#allocation5], 0
    // Predicated region
    $region2: #{tpu_custom_call.1} parent=1 // pred_check
      _
    $region3: #{tpu_custom_call.1} parent=1 // pred_check_branch
      %11 = sbr.rel (0) target = $region5
    $region4: #{tpu_custom_call.1} parent=1 // pred_region
      _
    $region5: #{tpu_custom_call.1} parent=1 // pred_fallthru
      _
    // Predicated region
    $region6: #{tpu_custom_call.1} parent=1 // pred_check
      _
    $region7: #{tpu_custom_call.1} parent=1 // pred_check_branch
      %13 = sbr.rel (0) target = $region9
    $region8: #{tpu_custom_call.1} parent=1 // pred_region
      %s15 = ssub.s32 128, 128
      %16 = vsyncadd [#allocation4], %s15
      %s18 = sshll.u32 [#allocation3], 4
      %s19 = int_to_ptr.vmem [resolvable:$true] %s18
      %21 = dma.hbm_to_vmem [thread:$0]  %s1, 128, %s19, [#allocation4]
    $region9: #{tpu_custom_call.1} parent=1 // pred_fallthru
      _
    // Predicated region
    $region10: #{tpu_custom_call.1} parent=1 // pred_check
      _
    $region11: #{tpu_custom_call.1} parent=1 // pred_check_branch
      %23 = sbr.rel (0) target = $region13
    $region12: #{tpu_custom_call.1} parent=1 // pred_region
      _
    $region13: #{tpu_custom_call.1} parent=1 // pred_fallthru
      _
    // Predicated region
    $region14: #{tpu_custom_call.1} parent=1 // pred_check
      _
    $region15: #{tpu_custom_call.1} parent=1 // pred_check_branch
      %25 = sbr.rel (0) target = $region17
    $region16: #{tpu_custom_call.1} parent=1 // pred_region
      %26 = dma.done [#allocation4], 128
    $region17: #{tpu_custom_call.1} parent=1 // pred_fallthru
      _
    %p27 = scmp.eq.s32.totalorder 0, 0
    // Predicated region
    $region18: #{tpu_custom_call.1} parent=1 // pred_check
      %p28 = pneg %p27
    $region19: #{tpu_custom_call.1} parent=1 // pred_check_branch
      %30 = sbr.rel (%p28) target = $region21
    $region20: #{tpu_custom_call.1} parent=1 // pred_region
      %s31 = scalar_lea.smem [#allocation2], 0
      %32 = sst [smem:[%s31]] 0.0
    $region21: #{tpu_custom_call.1} parent=1 // pred_fallthru
      _
    %v33 = vld [vmem:[%s0] sm:$0xff]
    %v34 = vld [vmem:[#allocation3] sm:$0xff]
    %v35 = vld [vmem:[%s2] sm:$0xff]
    %v36 = vmul.f32 %v33, %v34
    %vm37 = vcmask 261120
    %v38 = vsel %vm37, %v36, 0.0
    %39 = vadd.xlane.f32.xlu0 %v38
    %v40 = vpop.xlane.xlu0 %39
    %v41 = vmul.f32 %v33, %v33
    %v42 = vsel %vm37, %v41, 0.0
    %43 = vadd.xlane.f32.xlu0 %v42
    %v44 = vpop.xlane.xlu0 %43
    %v45 = vmul.f32 %v34, %v34
    %v46 = vsel %vm37, %v45, 0.0
    %47 = vadd.xlane.f32.xlu0 %v46
    %v48 = vpop.xlane.xlu0 %47
    %v49 = vmax.f32 %v44, 1e-14
    %v50 = vrsqrt.pop %v49
    %v51 = vmax.f32 %v48, 1e-14
    %v52 = vrsqrt.pop %v51
    %v53 = vmul.f32 %v50, %v52
    %v54 = vmul.f32 %v40, %v53
    %v55 = vsub.f32 %v54, %v35
    %v56 = vmul.f32 %v55, %v55
    %s57 = smul.u32 0, 8
    %v58 = vlaneseq
    %v59 = vshrl.u32 %v58, 7
    %v60 = vstv %s57
    %v61 = vadd.s32 %v60, %v59
    %vm62 = vcmp.lt.s32.totalorder %v61, 8
    %v63 = vsel %vm62, %v56, 0.0
    %s64 = sld [smem:[#allocation2]]
    %vm65 = vcmask 7168
    %v66 = vsel %vm65, %v63, 0.0
    %67 = vadd.xlane.f32.xlu0 %v66
    %v68 = vpop.xlane.xlu0 %67
    %v69 = vrot.slane %v68, 4
    %v70 = vadd.f32 %v68, %v69
    %v71 = vrot.slane %v70, 2
    %v72 = vadd.f32 %v70, %v71
    %v73 = vrot.slane %v72, 1
    %v74 = vadd.f32 %v72, %v73
    %s75 = vtos %v74
    %s76 = sadd.f32 %s64, %s75
    %s77 = scalar_lea.smem [#allocation2], 0
    %78 = sst [smem:[%s77]] %s76
    // Predicated region
    $region22: #{tpu_custom_call.1} parent=1 // pred_check
      %p79 = pneg %p27
    $region23: #{tpu_custom_call.1} parent=1 // pred_check_branch
      %81 = sbr.rel (%p79) target = $region25
    $region24: #{tpu_custom_call.1} parent=1 // pred_region
      %s82 = sld [smem:[#allocation2]]
      %v83 = vrcp.pop 8.0
      %s84 = vtos %v83
      %s85 = smul.f32 %s82, %s84
      %s86 = scalar_lea.smem [#allocation6], 0
      %87 = sst [smem:[%s86]] %s85
    $region25: #{tpu_custom_call.1} parent=1 // pred_fallthru
      _
    // Predicated region
    $region26: #{tpu_custom_call.1} parent=1 // pred_check
      _
    $region27: #{tpu_custom_call.1} parent=1 // pred_check_branch
      %89 = sbr.rel (0) target = $region29
    $region28: #{tpu_custom_call.1} parent=1 // pred_region
      %s91 = ssub.s32 16, 16
      %92 = vsyncadd [#allocation5], %s91
      %95 = dma.smem_to_hbm [#allocation6], 16, %s3, [#allocation5]
    $region29: #{tpu_custom_call.1} parent=1 // pred_fallthru
      _
    // Predicated region
    $region30: #{tpu_custom_call.1} parent=1 // pred_check
      _
    $region31: #{tpu_custom_call.1} parent=1 // pred_check_branch
      %97 = sbr.rel (0) target = $region33
    $region32: #{tpu_custom_call.1} parent=1 // pred_region
      %98 = dma.done [#allocation5], 16
    $region33: #{tpu_custom_call.1} parent=1 // pred_fallthru
      _
    %99 = sfence
    %100 = vsyncpa [#allocation4], 1
    %101 = vsyncpa [#allocation5], 1

</llo_original>
